<compile_context>
chip_gen: v5e
topology: v5e:2x2
jax: 0.10.0
libtpu: 0.0.40
codegen_flags: <defaults>
</compile_context>

<pallas_src>
import functools
import numpy as np
import jax
import jax.numpy as jnp
from jax.experimental import pallas as pl
from jax.experimental.pallas import tpu as pltpu


# ------------------------------- Pallas kernel ------------------------------ #

def _pointwise_bn_kernel(x_ref, w_ref, shift_ref, o_ref, *, nb, compute_dtype):
    # x_ref:     (nb, Cin, THW)  nb batch elements, THW spatial pixels (lane axis)
    # w_ref:     (Cout, Cin)     BN-scale-folded (block-diagonal if grouped) weight
    # shift_ref: (Cout, 1)       folded BN shift (+ conv bias), f32
    # o_ref:     (nb, Cout, THW)
    w = w_ref[...]
    if w.dtype != compute_dtype:
        w = w.astype(compute_dtype)
    shift = shift_ref[...]                                  # (Cout, 1), f32
    for b in range(nb):                                     # static unroll, nb <= 8
        xb = x_ref[b]                                       # (Cin, THW)
        if xb.dtype != compute_dtype:
            xb = xb.astype(compute_dtype)                   # in-kernel cast only
        y = jnp.dot(w, xb, preferred_element_type=jnp.float32)
        o_ref[b] = (y + shift).astype(o_ref.dtype)          # lane-dense store


# ------------------------------ small helpers ------------------------------- #

def _cdiv(a, b):
    return -(-a // b)


def _round_up(x, m):
    return _cdiv(x, m) * m


def fold_params(raw, *, cin, cout, groups, eps=1e-5):
    """Fold eval-mode BatchNorm + conv bias into a dense (Cout, Cin) weight and
    a (Cout, 1) shift.  Grouped conv becomes a block-diagonal dense weight."""
    w_grouped = raw["w"]                                    # (Cout, Cin // groups)
    scale = raw["gamma"] / jnp.sqrt(raw["var"] + eps)       # (Cout,)
    shift = raw["beta"] - raw["mean"] * scale + raw["b"] * scale

    cig, cog = cin // groups, cout // groups
    w_dense = jnp.zeros((cout, cin), jnp.float32)
    for g in range(groups):                                 # static, tiny loop
        w_dense = w_dense.at[g * cog:(g + 1) * cog, g * cig:(g + 1) * cig].set(
            w_grouped[g * cog:(g + 1) * cog, :])
    w_dense = w_dense * scale[:, None]                      # BN scale folded in
    return w_dense, shift[:, None].astype(jnp.float32)


# ------------------------------ kernel wrapper ------------------------------- #

def pointwise_conv2d_bn(x_nchw, w_folded, shift_col, *, tile_hw=2048,
                        compute_dtype=None, num_tensorcores=1):
    """Forward of PointwiseConv2d (1x1 conv + eval-mode BatchNorm), NCHW in/out."""
    N, Cin, H, W = x_nchw.shape
    Cout = w_folded.shape[0]
    HW = H * W
    if compute_dtype is None:
        compute_dtype = x_nchw.dtype

    # contiguous (row-major) view: (N, Cin, H, W) -> (N, Cin, HW); no transpose.
    x = x_nchw.reshape(N, Cin, HW)
    w = w_folded.astype(compute_dtype)          # tiny parameter cast, done once

    # ---- spatial tile: largest lane-aligned tile up to tile_hw; NO padding ----
    thw = min(_round_up(tile_hw, 128), _round_up(HW, 128))

    # ---- small-spatial layers: batch several images per grid step ----
    nb = 1
    if _cdiv(HW, thw) == 1:
        cap = int(min(N, max(1, tile_hw // thw), 8))
        for d in range(cap, 0, -1):             # largest divisor of N -> no
            if N % d == 0:                      # partial blocks on the batch axis
                nb = d
                break

    # ---- VMEM footprint: 2-deep activation buffers + f32 matmul intermediate --
    esz_x = jnp.dtype(x.dtype).itemsize
    esz_c = jnp.dtype(compute_dtype).itemsize
    esz_o = jnp.dtype(x_nchw.dtype).itemsize
    esz_w = jnp.dtype(w.dtype).itemsize

    def footprint(nb_, thw_):
        act_in = 2 * nb_ * Cin * thw_ * esz_x               # x tiles (double buf)
        act_out = 2 * nb_ * Cout * thw_ * esz_o             # out tiles (double buf)
        acc = nb_ * Cout * thw_ * 4                         # f32 matmul result
        cast = nb_ * Cin * thw_ * esz_c if esz_c != esz_x else 0
        const = 2 * (Cout * Cin * esz_w + Cout * 4)         # weight + shift
        return act_in + act_out + acc + cast + const

    budget = 24 * 2**20
    while footprint(nb, thw) > budget and (nb > 1 or thw > 128):
        if nb > 1:
            nb = 1
        else:
            thw = max(128, _round_up(thw // 2, 128))

    # ---- v7x (2 TCs/chip): make the step count split evenly across cores ----
    if num_tensorcores > 1:
        if (_cdiv(N, nb) * _cdiv(HW, thw)) % num_tensorcores != 0:
            cand = thw - 128
            while cand >= 128:
                if (_cdiv(N, nb) * _cdiv(HW, cand)) % num_tensorcores == 0:
                    thw = cand
                    break
                cand -= 128

    grid = (_cdiv(N, nb), _cdiv(HW, thw))
    vmem_limit = int(min(max(2 * footprint(nb, thw), 16 * 2**20), 32 * 2**20))

    cost = pl.CostEstimate(
        flops=2 * N * Cout * Cin * HW,
        transcendentals=0,
        bytes_accessed=int(N * HW * (Cin * esz_x + Cout * esz_o)
                           + Cout * Cin * esz_w + Cout * 4),
    )

    kernel = functools.partial(_pointwise_bn_kernel, nb=nb,
                               compute_dtype=compute_dtype)

    out = pl.pallas_call(
        kernel,
        # output is produced directly in the final dtype -> no convert pass
        out_shape=jax.ShapeDtypeStruct((N, Cout, HW), x_nchw.dtype),
        grid=grid,
        in_specs=[
            pl.BlockSpec((nb, Cin, thw), lambda n, j: (n, 0, j)),
            pl.BlockSpec((Cout, Cin), lambda n, j: (0, 0)),   # resident weight
            pl.BlockSpec((Cout, 1), lambda n, j: (0, 0)),     # resident shift
        ],
        out_specs=pl.BlockSpec((nb, Cout, thw), lambda n, j: (n, 0, j)),
        compiler_params=pltpu.CompilerParams(
            dimension_semantics=("parallel", "parallel"),
            vmem_limit_bytes=vmem_limit,
        ),
        cost_estimate=cost,
    )(x, w, shift_col)

    return out.reshape(N, Cout, H, W)


# ------------------------------ parameter setup ------------------------------ #

def init_raw_params(key, cin, cout, groups):
    """Random parameters mimicking nn.Conv2d(cin, cout, 1, groups=groups) +
    nn.BatchNorm2d(cout) in eval mode."""
    ks = jax.random.split(key, 6)
    return {
        "w": 0.2 * jax.random.normal(ks[0], (cout, cin // groups), jnp.float32),
        "b": 0.1 * jax.random.normal(ks[1], (cout,), jnp.float32),
        "gamma": 1.0 + 0.1 * jax.random.normal(ks[2], (cout,), jnp.float32),
        "beta": 0.1 * jax.random.normal(ks[3], (cout,), jnp.float32),
        "mean": 0.1 * jax.random.normal(ks[4], (cout,), jnp.float32),
        "var": 1.0 + 0.1 * jnp.abs(jax.random.normal(ks[5], (cout,), jnp.float32)),
    }


# ---------------------------- pure-JAX reference ----------------------------- #

def ref_forward(x_nchw, raw, *, groups, eps=1e-5):
    cout, cig = raw["w"].shape
    cog = cout // groups
    outs = []
    for g in range(groups):
        xg = x_nchw[:, g * cig:(g + 1) * cig]               # (N, cig, H, W)
        wg = raw["w"][g * cog:(g + 1) * cog]                # (cog, cig)
        outs.append(jnp.einsum("nchw,oc->nohw", xg, wg))
    y = jnp.concatenate(outs, axis=1) + raw["b"][None, :, None, None]
    scale = raw["gamma"] / jnp.sqrt(raw["var"] + eps)
    y = (y - raw["mean"][None, :, None, None]) * scale[None, :, None, None] \
        + raw["beta"][None, :, None, None]
    return y


# ----------------------------------- main ------------------------------------ #

if __name__ == "__main__":
    key = jax.random.PRNGKey(0)
    kx1, kp1, kx2, kp2 = jax.random.split(key, 4)

    # --- test 1: spatially tiled path, multiple grid steps (HW multiple of 128)
    N, Cin, Cout, H, W, groups = 2, 16, 32, 16, 16, 2
    x = jax.random.normal(kx1, (N, Cin, H, W), jnp.float32)
    raw = init_raw_params(kp1, Cin, Cout, groups)
    w_folded, shift_col = fold_params(raw, cin=Cin, cout=Cout, groups=groups)

    fwd = jax.jit(functools.partial(pointwise_conv2d_bn, tile_hw=128))
    out = jax.block_until_ready(fwd(x, w_folded, shift_col))
    ref = ref_forward(x, raw, groups=groups)
    np.testing.assert_allclose(np.asarray(out), np.asarray(ref),
                               rtol=1e-4, atol=1e-4)
    assert out.shape == (N, Cout, H, W) and out.dtype == x.dtype

    # --- test 2: ragged spatial (HW=49, partial boundary block on the lane
    #     axis) + multi-batch-per-step path (nb > 1), like ShuffleNet H=W=7.
    N2, Cin2, Cout2, H2, W2, g2 = 4, 8, 16, 7, 7, 4
    x2 = jax.random.normal(kx2, (N2, Cin2, H2, W2), jnp.float32)
    raw2 = init_raw_params(kp2, Cin2, Cout2, g2)
    w2, s2 = fold_params(raw2, cin=Cin2, cout=Cout2, groups=g2)

    out2 = jax.block_until_ready(jax.jit(pointwise_conv2d_bn)(x2, w2, s2))
    ref2 = ref_forward(x2, raw2, groups=g2)
    np.testing.assert_allclose(np.asarray(out2), np.asarray(ref2),
                               rtol=1e-4, atol=1e-4)
    assert out2.shape == (N2, Cout2, H2, W2) and out2.dtype == x2.dtype

    print("KERNEL_OK")
</pallas_src>

<mosaic_0001>
module attributes {stable_mosaic.version = 11 : i64} {
  func.func @_pointwise_bn_kernel(%arg0: i32, %arg1: i32, %arg2: memref<1x16x128xf32, #tpu.memory_space<vmem>>, %arg3: memref<32x16xf32, #tpu.memory_space<vmem>>, %arg4: memref<32x1xf32, #tpu.memory_space<vmem>>, %arg5: memref<1x32x128xf32, #tpu.memory_space<vmem>>) attributes {dimension_semantics = [#tpu.dimension_semantics<parallel>, #tpu.dimension_semantics<parallel>], iteration_bounds = array<i64: 2, 2>, scalar_prefetch = 0 : i64, scratch_operands = 0 : i64, tpu.core_type = #tpu.core_type<tc>, window_params = [{transform_indices = @transform_0, window_bounds = array<i64: 1, 16, 128>}, {pipeline_mode = #tpu.pipeline_mode<synchronous>, transform_indices = @transform_1, window_bounds = array<i64: 32, 16>}, {pipeline_mode = #tpu.pipeline_mode<synchronous>, transform_indices = @transform_2, window_bounds = array<i64: 32, 1>}, {transform_indices = @transform_3, window_bounds = array<i64: 1, 32, 128>}]} {
    %c0 = arith.constant 0 : index
    %c0_0 = arith.constant 0 : index
    %0 = vector.load %arg3[%c0, %c0_0] : memref<32x16xf32, #tpu.memory_space<vmem>>, vector<32x16xf32>
    %c0_1 = arith.constant 0 : index
    %c0_2 = arith.constant 0 : index
    %1 = vector.load %arg4[%c0_1, %c0_2] : memref<32x1xf32, #tpu.memory_space<vmem>>, vector<32x1xf32>
    %c0_3 = arith.constant 0 : index
    %c0_4 = arith.constant 0 : index
    %c0_5 = arith.constant 0 : index
    %2 = vector.load %arg2[%c0_3, %c0_4, %c0_5] : memref<1x16x128xf32, #tpu.memory_space<vmem>>, vector<1x16x128xf32>
    %3 = vector.shape_cast %2 : vector<1x16x128xf32> to vector<16x128xf32>
    %cst = arith.constant dense<0.000000e+00> : vector<32x128xf32>
    %4 = tpu.matmul %0, %3, %cst {dimension_numbers = #tpu.dot_dimension_numbers<[1], [0], [0], [1], [0, 0, 1, 1], [], []>} : vector<32x16xf32>, vector<16x128xf32>, vector<32x128xf32> -> vector<32x128xf32>
    %5 = vector.broadcast %1 : vector<32x1xf32> to vector<32x128xf32>
    %6 = arith.addf %4, %5 : vector<32x128xf32>
    %c0_6 = arith.constant 0 : index
    %c0_7 = arith.constant 0 : index
    %c0_8 = arith.constant 0 : index
    %7 = vector.load %arg5[%c0_6, %c0_7, %c0_8] : memref<1x32x128xf32, #tpu.memory_space<vmem>>, vector<1x32x128xf32>
    %8 = vector.shape_cast %7 : vector<1x32x128xf32> to vector<32x128xf32>
    %9 = vector.shape_cast %6 : vector<32x128xf32> to vector<1x32x128xf32>
    tpu.vector_store %arg5[%c0_6, %c0_7, %c0_8], %9 {strides = array<i32>} : memref<1x32x128xf32, #tpu.memory_space<vmem>>, vector<1x32x128xf32>,
    return
  }
  func.func @transform_0(%arg0: i32, %arg1: i32) -> (i32, i32, i32) {
    %c0_i32 = arith.constant 0 : i32
    %c0_i32_0 = arith.constant 0 : i32
    return %arg0, %c0_i32, %arg1 : i32, i32, i32
  }
  func.func @transform_1(%arg0: i32, %arg1: i32) -> (i32, i32) {
    %c0_i32 = arith.constant 0 : i32
    %c0_i32_0 = arith.constant 0 : i32
    %c0_i32_1 = arith.constant 0 : i32
    return %c0_i32, %c0_i32_0 : i32, i32
  }
  func.func @transform_2(%arg0: i32, %arg1: i32) -> (i32, i32) {
    %c0_i32 = arith.constant 0 : i32
    %c0_i32_0 = arith.constant 0 : i32
    %c0_i32_1 = arith.constant 0 : i32
    return %c0_i32, %c0_i32_0 : i32, i32
  }
  func.func @transform_3(%arg0: i32, %arg1: i32) -> (i32, i32, i32) {
    %c0_i32 = arith.constant 0 : i32
    %c0_i32_0 = arith.constant 0 : i32
    return %arg0, %c0_i32, %arg1 : i32, i32, i32
  }
}

</mosaic_0001>

<llo_original>
// kernel: pointwise_conv2d_bn.1
$region0: #{pointwise_conv2d_bn.1}
  #allocation0 [shape = 'u32[]', space=smem, size = 0x4, offset = 0x4, fixed_abs, tag = 'smem constant byte address 0x4 - core index']
  #allocation1 [shape = 'u32[72,128]{1,0:T(1,128)}', space=vmem, size = 0x9000, scoped, tag = 'internal scratch']
  %s0 = inlined_call_operand.vmem [shape: f32[2,16,256], index: 0, kind: input, shape index: {}]
  %s1 = inlined_call_operand.vmem [shape: f32[32,16], index: 1, kind: input, shape index: {}]
  %s2 = inlined_call_operand.vmem [shape: f32[32,1], index: 2, kind: input, shape index: {}]
  %s3 = inlined_call_operand.vmem [shape: f32[2,32,256], index: 3, kind: output, shape index: {}]
  %s4 = sld [smem:[#allocation0]]
  $region117: #{pointwise_conv2d_bn.1} parent=0
    _
  %s6 = ssub.s32 1, %s4
  %s7 = scalar_select 0, %s6, %s4
  $region1: #{pointwise_conv2d_bn.1} parent=0
    #allocation2 [shape = 'u8[16384]{0}', space=vmem, size = 0x4000, scoped, tag = 'input window, operand 0']
    #allocation3 [shape = 'u8[32768]{0}', space=vmem, size = 0x8000, scoped, tag = 'output window, operand 0']
    loop: start=0, step=1, limit=6
    $region2: #{pointwise_conv2d_bn.1} parent=1 // loop_pre_header
      _
    $region3: #{pointwise_conv2d_bn.1} parent=1 // loop_header
      %s9 = sphi 0, %s13
      %p10 = scmp.ge.s32.totalorder %s9, 6
      %s16 = sphi 0, %s28
      %s17 = sphi 0, %s24
      %s18 = sphi 0, %s16
      %s19 = sphi 0, %s17
      %s20 = sphi 0, %s18
      %s21 = sphi 0, %s19
      %s33 = sphi 0, %s35
      %s36 = sphi 0, %s33
      %s37 = sphi 0, %s36
      %s53 = sphi 0, %s37
      %s57 = sphi 0, %s57
      %s59 = sphi 0, %s57
      %s60 = sphi 0, %s59
      %s74 = sphi 0, %s60
      %s78 = sphi 0, %s78
      %s80 = sphi 0, %s78
      %s81 = sphi 0, %s80
      %s95 = sphi 0, %s81
      %s103 = sphi 0, %s105
      %s106 = sphi 0, %s103
      %s107 = sphi 0, %s106
      %s123 = sphi 0, %s107
    $region4: #{pointwise_conv2d_bn.1} parent=1 // loop_header_branch
      %12 = sbr.rel (%p10) target = $region8
    $region5: #{pointwise_conv2d_bn.1} parent=1 // loop_body
      %s14 = ssub.s32 %s9, 1
      %s15 = ssub.s32 %s9, 2
      %s22 = sadd.s32 1, %s17
      %p23 = scmp.ge.s32.totalorder %s22, 2
      %s24 = scalar_select %p23, 0, %s22
      %s25 = sadd.s32 1, %s16
      %s26 = scalar_select %p23, %s25, %s16
      %p27 = scmp.ge.s32.totalorder %s26, 2
      %s28 = scalar_select %p27, 0, %s26
      %s29 = ssub.s32 %s16, %s28
      %s30 = ssub.s32 %s17, %s24
      %s31 = sor.u32 %s29, %s30
      %p32 = scmp.eq.s32.totalorder %s31, 0
      %s34 = sadd.s32 %s33, 1
      %s35 = scalar_select %p32, %s33, %s34
      %p38 = pneg %p32
      %p39 = scmp.eq.s32.totalorder %s9, 3
      %p40 = por %p38, %p39
      %p41 = scmp.ne.s32.totalorder %s33, %s36
      %p42 = scmp.eq.s32.totalorder %s9, 0
      %p43 = por %p41, %p42
      %p44 = scmp.ne.s32.totalorder %s33, %s36
      %p45 = scmp.eq.s32.totalorder %s14, 3
      %p46 = por %p44, %p45
      %p47 = scmp.ne.s32.totalorder %s36, %s37
      %p48 = scmp.eq.s32.totalorder %s14, 0
      %p49 = por %p47, %p48
      %p50 = scmp.ne.s32.totalorder %s36, %s37
      %p51 = scmp.eq.s32.totalorder %s15, 3
      %p52 = por %p50, %p51
      %p54 = scmp.ne.s32.totalorder %s37, %s53
      %p55 = scmp.eq.s32.totalorder %s15, 0
      %p56 = por %p54, %p55
      %s58 = sadd.s32 %s57, 1
      %p61 = scmp.eq.s32.totalorder %s9, 3
      %p62 = scmp.ne.s32.totalorder %s57, %s59
      %p63 = scmp.eq.s32.totalorder %s9, 0
      %p64 = por %p62, %p63
      %p65 = scmp.ne.s32.totalorder %s57, %s59
      %p66 = scmp.eq.s32.totalorder %s14, 3
      %p67 = por %p65, %p66
      %p68 = scmp.ne.s32.totalorder %s59, %s60
      %p69 = scmp.eq.s32.totalorder %s14, 0
      %p70 = por %p68, %p69
      %p71 = scmp.ne.s32.totalorder %s59, %s60
      %p72 = scmp.eq.s32.totalorder %s15, 3
      %p73 = por %p71, %p72
      %p75 = scmp.ne.s32.totalorder %s60, %s74
      %p76 = scmp.eq.s32.totalorder %s15, 0
      %p77 = por %p75, %p76
      %s79 = sadd.s32 %s78, 1
      %p82 = scmp.eq.s32.totalorder %s9, 3
      %p83 = scmp.ne.s32.totalorder %s78, %s80
      %p84 = scmp.eq.s32.totalorder %s9, 0
      %p85 = por %p83, %p84
      %p86 = scmp.ne.s32.totalorder %s78, %s80
      %p87 = scmp.eq.s32.totalorder %s14, 3
      %p88 = por %p86, %p87
      %p89 = scmp.ne.s32.totalorder %s80, %s81
      %p90 = scmp.eq.s32.totalorder %s14, 0
      %p91 = por %p89, %p90
      %p92 = scmp.ne.s32.totalorder %s80, %s81
      %p93 = scmp.eq.s32.totalorder %s15, 3
      %p94 = por %p92, %p93
      %p96 = scmp.ne.s32.totalorder %s81, %s95
      %p97 = scmp.eq.s32.totalorder %s15, 0
      %p98 = por %p96, %p97
      %s99 = ssub.s32 %s16, %s28
      %s100 = ssub.s32 %s17, %s24
      %s101 = sor.u32 %s99, %s100
      %p102 = scmp.eq.s32.totalorder %s101, 0
      %s104 = sadd.s32 %s103, 1
      %s105 = scalar_select %p102, %s103, %s104
      %p108 = pneg %p102
      %p109 = scmp.eq.s32.totalorder %s9, 3
      %p110 = por %p108, %p109
      %p111 = scmp.ne.s32.totalorder %s103, %s106
      %p112 = scmp.eq.s32.totalorder %s9, 0
      %p113 = por %p111, %p112
      %p114 = scmp.ne.s32.totalorder %s103, %s106
      %p115 = scmp.eq.s32.totalorder %s14, 3
      %p116 = por %p114, %p115
      %p117 = scmp.ne.s32.totalorder %s106, %s107
      %p118 = scmp.eq.s32.totalorder %s14, 0
      %p119 = por %p117, %p118
      %p120 = scmp.ne.s32.totalorder %s106, %s107
      %p121 = scmp.eq.s32.totalorder %s15, 3
      %p122 = por %p120, %p121
      %p124 = scmp.ne.s32.totalorder %s107, %s123
      %p125 = scmp.eq.s32.totalorder %s15, 0
      %p126 = por %p124, %p125
      %p127 = scmp.le.s32.totalorder 1, %s9
      %p128 = scmp.lt.s32.totalorder %s9, 5
      %p129 = pnand %p127, %p128
      %p130 = pneg %p129
      // Predicated region
      $region9: #{pointwise_conv2d_bn.1} parent=5 // pred_check
        _
      $region10: #{pointwise_conv2d_bn.1} parent=5 // pred_check_branch
        %132 = sbr.rel (%p129) target = $region12
      $region11: #{pointwise_conv2d_bn.1} parent=5 // pred_region
        %s133 = ssub.s32 %s9, 1
        // Predicated region
        $region13: #{pointwise_conv2d_bn.1} parent=11 // pred_check
          %p134 = pneg %p70
        $region14: #{pointwise_conv2d_bn.1} parent=11 // pred_check_branch
          %136 = sbr.rel (%p134) target = $region16
        $region15: #{pointwise_conv2d_bn.1} parent=11 // pred_region
          _
        $region16: #{pointwise_conv2d_bn.1} parent=11 // pred_fallthru
          _
        // Predicated region
        $region17: #{pointwise_conv2d_bn.1} parent=11 // pred_check
          %p137 = pneg %p91
        $region18: #{pointwise_conv2d_bn.1} parent=11 // pred_check_branch
          %139 = sbr.rel (%p137) target = $region20
        $region19: #{pointwise_conv2d_bn.1} parent=11 // pred_region
          _
        $region20: #{pointwise_conv2d_bn.1} parent=11 // pred_fallthru
          _
      $region12: #{pointwise_conv2d_bn.1} parent=5 // pred_fallthru
        _
      %p140 = scmp.lt.s32.totalorder %s9, 4
      // Predicated region
      $region21: #{pointwise_conv2d_bn.1} parent=5 // pred_check
        %p141 = pneg %p140
      $region22: #{pointwise_conv2d_bn.1} parent=5 // pred_check_branch
        %143 = sbr.rel (%p141) target = $region24
      $region23: #{pointwise_conv2d_bn.1} parent=5 // pred_region
        // Predicated region
        $region25: #{pointwise_conv2d_bn.1} parent=23 // pred_check
          %p144 = pneg %p43
        $region26: #{pointwise_conv2d_bn.1} parent=23 // pred_check_branch
          %146 = sbr.rel (%p144) target = $region28
        $region27: #{pointwise_conv2d_bn.1} parent=23 // pred_region
          %s147 = sand.u32 %s33, 1
          %s148 = sand.u32 %s33, 1
          %s149 = smul.addr %s148, 16
          %s150 = scalar_lea.vmem [#allocation2], %s149
          %s151 = smul.addr %s16, 4
          %s152 = sadd.s32 %s17, %s151
          %s153 = smul.addr %s152, 8
          %s154 = scalar_lea.vmem %s0, %s153
          // Predicated region
          $region29: #{pointwise_conv2d_bn.1} parent=27 // pred_check
            _
          $region30: #{pointwise_conv2d_bn.1} parent=27 // pred_check_branch
            %156 = sbr.rel (0) target = $region32
          $region31: #{pointwise_conv2d_bn.1} parent=27 // pred_region
            // Predicated region
            $region33: #{pointwise_conv2d_bn.1} parent=31 // pred_check
              _
            $region34: #{pointwise_conv2d_bn.1} parent=31 // pred_check_branch
              %158 = sbr.rel (0) target = $region36
            $region35: #{pointwise_conv2d_bn.1} parent=31 // pred_region
              // Predicated region
              $region48: #{pointwise_conv2d_bn.1} parent=35 // pred_check
                _
              $region49: #{pointwise_conv2d_bn.1} parent=35 // pred_check_branch
                %176 = sbr.rel (0) target = $region51
              $region50: #{pointwise_conv2d_bn.1} parent=35 // pred_region
                loop: start=0, step=1, limit=1
                $region52: #{pointwise_conv2d_bn.1} parent=50 // loop_pre_header
                  _
                $region53: #{pointwise_conv2d_bn.1} parent=50 // loop_header
                  %s178 = sphi 0, %s182
                  %p179 = scmp.ge.s32.totalorder %s178, 1
                  %s183 = sphi %s154, %s154
                  %s184 = sphi %s150, %s150
                $region54: #{pointwise_conv2d_bn.1} parent=50 // loop_header_branch
                  %181 = sbr.rel (%p179) target = $region58
                $region55: #{pointwise_conv2d_bn.1} parent=50 // loop_body
                  %v185 = vld [vmem:[%s183] sm:$0xff]
                  %186 = vst [vmem:[%s184] sm:$0xff] %v185
                  %v187 = vld [vmem:[%s183 + $0x10] sm:$0xff]
                  %188 = vst [vmem:[%s184 + $0x8] sm:$0xff] %v187
                $region56: #{pointwise_conv2d_bn.1} parent=50 // loop_footer
                  %s182 = sadd.s32 1, %s178
                $region57: #{pointwise_conv2d_bn.1} parent=50 // loop_footer_branch
                  %177 = sbr.rel target = $region53
                $region58: #{pointwise_conv2d_bn.1} parent=50 // loop_exit
                  _
              $region51: #{pointwise_conv2d_bn.1} parent=35 // pred_fallthru
                _
              // Predicated region
              $region59: #{pointwise_conv2d_bn.1} parent=35 // pred_check
                _
              $region60: #{pointwise_conv2d_bn.1} parent=35 // pred_check_branch
                %190 = sbr.rel target = $region62
              $region61: #{pointwise_conv2d_bn.1} parent=35 // pred_region
                _
              $region62: #{pointwise_conv2d_bn.1} parent=35 // pred_fallthru
                _
            $region36: #{pointwise_conv2d_bn.1} parent=31 // pred_fallthru
              _
            // Predicated region
            $region37: #{pointwise_conv2d_bn.1} parent=31 // pred_check
              _
            $region38: #{pointwise_conv2d_bn.1} parent=31 // pred_check_branch
              %160 = sbr.rel target = $region40
            $region39: #{pointwise_conv2d_bn.1} parent=31 // pred_region
              %s162 = ssub.s32 256, 1
              loop: start=0, step=1, limit=1
              $region41: #{pointwise_conv2d_bn.1} parent=39 // loop_pre_header
                _
              $region42: #{pointwise_conv2d_bn.1} parent=39 // loop_header
                %s164 = sphi 0, %s168
                %p165 = scmp.ge.s32.totalorder %s164, 1
                %s169 = sphi %s154, %s154
                %s170 = sphi %s150, %s150
              $region43: #{pointwise_conv2d_bn.1} parent=39 // loop_header_branch
                %167 = sbr.rel (%p165) target = $region47
              $region44: #{pointwise_conv2d_bn.1} parent=39 // loop_body
                %v171 = vld [vmem:[%s169] sm:%s162]
                %172 = vst [vmem:[%s170] sm:%s162] %v171
                %v173 = vld [vmem:[%s169 + $0x10] sm:%s162]
                %174 = vst [vmem:[%s170 + $0x8] sm:%s162] %v173
              $region45: #{pointwise_conv2d_bn.1} parent=39 // loop_footer
                %s168 = sadd.s32 1, %s164
              $region46: #{pointwise_conv2d_bn.1} parent=39 // loop_footer_branch
                %163 = sbr.rel target = $region42
              $region47: #{pointwise_conv2d_bn.1} parent=39 // loop_exit
                _
            $region40: #{pointwise_conv2d_bn.1} parent=31 // pred_fallthru
              _
          $region32: #{pointwise_conv2d_bn.1} parent=27 // pred_fallthru
            _
          %191 = vnop
        $region28: #{pointwise_conv2d_bn.1} parent=23 // pred_fallthru
          _
      $region24: #{pointwise_conv2d_bn.1} parent=5 // pred_fallthru
        _
      %p192 = scmp.le.s32.totalorder 1, %s9
      %p193 = scmp.lt.s32.totalorder %s9, 5
      %p194 = pnand %p192, %p193
      %p195 = pneg %p194
      // Predicated region
      $region63: #{pointwise_conv2d_bn.1} parent=5 // pred_check
        _
      $region64: #{pointwise_conv2d_bn.1} parent=5 // pred_check_branch
        %197 = sbr.rel (%p194) target = $region66
      $region65: #{pointwise_conv2d_bn.1} parent=5 // pred_region
        %s198 = ssub.s32 %s9, 1
        %s199 = sand.u32 %s36, 1
        %s200 = sand.u32 %s36, 1
        %s201 = smul.addr %s200, 16
        %s202 = scalar_lea.vmem [#allocation2], %s201
        // Predicated region
        $region67: #{pointwise_conv2d_bn.1} parent=65 // pred_check
          %p203 = pneg %p49
        $region68: #{pointwise_conv2d_bn.1} parent=65 // pred_check_branch
          %205 = sbr.rel (%p203) target = $region70
        $region69: #{pointwise_conv2d_bn.1} parent=65 // pred_region
          _
        $region70: #{pointwise_conv2d_bn.1} parent=65 // pred_fallthru
          _
        %s206 = sand.u32 %s36, 1
        %s207 = sand.u32 %s36, 1
        %s208 = smul.addr %s207, 16
        %s209 = scalar_lea.vmem [#allocation2], %s208
        %p210 = pneg %p49
        %p211 = pneg %p46
        %p212 = pneg %p70
        %p213 = pneg %p67
        %p214 = pneg %p91
        %p215 = pneg %p88
        %p216 = pneg %p119
        %p217 = pneg %p116
        %s218 = sand.u32 %s106, 1
        %s219 = sand.u32 %s106, 1
        %s220 = smul.addr %s219, 32
        %s221 = scalar_lea.vmem [#allocation3], %s220
        %v222 = vld [vmem:[%s1] sm:$0xff]
        %v223 = vld [vmem:[%s1 + $0x8] sm:$0xff]
        %v224 = vld [vmem:[%s1 + $0x10] sm:$0xff]
        %v225 = vld [vmem:[%s1 + $0x18] sm:$0xff]
        %v226 = vld [vmem:[%s2] sm:$0xff]
        %v227 = vld [vmem:[%s2 + $0x8] sm:$0xff]
        %v228 = vld [vmem:[%s2 + $0x10] sm:$0xff]
        %v229 = vld [vmem:[%s2 + $0x18] sm:$0xff]
        %v230 = vld [vmem:[%s202] sm:$0xff]
        %v231 = vld [vmem:[%s202 + $0x8] sm:$0xff]
        %233 = vset.pattern.permute.xlu0 0
        %234 = vperm.xlu0 %233, %v226
        %v235 = vpop.permute.xlu0 %234
        %238 = vset.pattern.permute.xlu0 0
        %239 = vperm.xlu0 %238, %v227
        %v240 = vpop.permute.xlu0 %239
        %243 = vset.pattern.permute.xlu0 0
        %244 = vperm.xlu0 %243, %v228
        %v245 = vpop.permute.xlu0 %244
        %248 = vset.pattern.permute.xlu0 0
        %249 = vperm.xlu0 %248, %v229
        %v250 = vpop.permute.xlu0 %249
        %vm252 = vcmask 130048
        %v254 = vsel %vm252, %v222, 0
        %v257 = vsel %vm252, %v223, 0
        %v260 = vsel %vm252, %v224, 0
        %v263 = vsel %vm252, %v225, 0
        %265 = vmatpush.msra.mxu0 0.0
        %266 = vmatpush.msra.mxu0 0.0
        %267 = vmatpush.msra.mxu0 0.0
        %268 = vmatpush.msra.mxu0 0.0
        %269 = vmatpush.msra.mxu0 0.0
        %270 = vmatpush.msra.mxu0 0.0
        %271 = vmatpush.msra.mxu0 0.0
        %272 = vmatpush.msra.mxu0 0.0
        %273 = vmatpush.msra.mxu0 0.0
        %274 = vmatpush.msra.mxu0 0.0
        %275 = vmatpush.msra.mxu0 0.0
        %276 = vmatpush.msra.mxu0 0.0
        %277 = vmatpush.msra.mxu0 0.0
        %278 = vmatpush.msra.mxu0 0.0
        %279 = vmatpush.msra.mxu0 %v231
        %280 = vmatpush.msra.mxu0 %v230
        %281 = vmatmul.f32.gmra.mxu0 %v254
        %v282 = vpop.f32.mrf.mxu0
        %v283 = vadd.f32 %v235, %v282
        %284 = vmatmul.f32.gmra.mxu0 %v257
        %v285 = vpop.f32.mrf.mxu0
        %v286 = vadd.f32 %v240, %v285
        %287 = vmatmul.f32.gmra.mxu0 %v260
        %v288 = vpop.f32.mrf.mxu0
        %v289 = vadd.f32 %v245, %v288
        %290 = vmatmul.f32.gmra.mxu0 %v263
        %v291 = vpop.f32.mrf.mxu0
        %v292 = vadd.f32 %v250, %v291
        %293 = vdwg.mxu0
        %294 = vst [vmem:[%s221] sm:$0xff] %v283
        %295 = vst [vmem:[%s221 + $0x8] sm:$0xff] %v286
        %296 = vst [vmem:[%s221 + $0x10] sm:$0xff] %v289
        %297 = vst [vmem:[%s221 + $0x18] sm:$0xff] %v292
        %s298 = sand.u32 %s106, 1
        %s299 = sand.u32 %s106, 1
        %s300 = smul.addr %s299, 32
        %s301 = scalar_lea.vmem [#allocation3], %s300
        // Predicated region
        $region71: #{pointwise_conv2d_bn.1} parent=65 // pred_check
          %p302 = pneg %p116
        $region72: #{pointwise_conv2d_bn.1} parent=65 // pred_check_branch
          %304 = sbr.rel (%p302) target = $region74
        $region73: #{pointwise_conv2d_bn.1} parent=65 // pred_region
          %s305 = smul.addr %s18, 8
          %s306 = sadd.s32 %s19, %s305
          %s307 = smul.addr %s306, 8
          %s308 = scalar_lea.vmem %s3, %s307
          // Predicated region
          $region75: #{pointwise_conv2d_bn.1} parent=73 // pred_check
            _
          $region76: #{pointwise_conv2d_bn.1} parent=73 // pred_check_branch
            %310 = sbr.rel (0) target = $region78
          $region77: #{pointwise_conv2d_bn.1} parent=73 // pred_region
            // Predicated region
            $region79: #{pointwise_conv2d_bn.1} parent=77 // pred_check
              _
            $region80: #{pointwise_conv2d_bn.1} parent=77 // pred_check_branch
              %312 = sbr.rel (0) target = $region82
            $region81: #{pointwise_conv2d_bn.1} parent=77 // pred_region
              // Predicated region
              $region94: #{pointwise_conv2d_bn.1} parent=81 // pred_check
                _
              $region95: #{pointwise_conv2d_bn.1} parent=81 // pred_check_branch
                %334 = sbr.rel (0) target = $region97
              $region96: #{pointwise_conv2d_bn.1} parent=81 // pred_region
                loop: start=0, step=1, limit=1
                $region98: #{pointwise_conv2d_bn.1} parent=96 // loop_pre_header
                  _
                $region99: #{pointwise_conv2d_bn.1} parent=96 // loop_header
                  %s336 = sphi 0, %s340
                  %p337 = scmp.ge.s32.totalorder %s336, 1
                  %s341 = sphi %s301, %s301
                  %s342 = sphi %s308, %s308
                $region100: #{pointwise_conv2d_bn.1} parent=96 // loop_header_branch
                  %339 = sbr.rel (%p337) target = $region104
                $region101: #{pointwise_conv2d_bn.1} parent=96 // loop_body
                  %v343 = vld [vmem:[%s341] sm:$0xff]
                  %344 = vst [vmem:[%s342] sm:$0xff] %v343
                  %v345 = vld [vmem:[%s341 + $0x8] sm:$0xff]
                  %346 = vst [vmem:[%s342 + $0x10] sm:$0xff] %v345
                  %v347 = vld [vmem:[%s341 + $0x10] sm:$0xff]
                  %348 = vst [vmem:[%s342 + $0x20] sm:$0xff] %v347
                  %v349 = vld [vmem:[%s341 + $0x18] sm:$0xff]
                  %350 = vst [vmem:[%s342 + $0x30] sm:$0xff] %v349
                $region102: #{pointwise_conv2d_bn.1} parent=96 // loop_footer
                  %s340 = sadd.s32 1, %s336
                $region103: #{pointwise_conv2d_bn.1} parent=96 // loop_footer_branch
                  %335 = sbr.rel target = $region99
                $region104: #{pointwise_conv2d_bn.1} parent=96 // loop_exit
                  _
              $region97: #{pointwise_conv2d_bn.1} parent=81 // pred_fallthru
                _
              // Predicated region
              $region105: #{pointwise_conv2d_bn.1} parent=81 // pred_check
                _
              $region106: #{pointwise_conv2d_bn.1} parent=81 // pred_check_branch
                %352 = sbr.rel target = $region108
              $region107: #{pointwise_conv2d_bn.1} parent=81 // pred_region
                _
              $region108: #{pointwise_conv2d_bn.1} parent=81 // pred_fallthru
                _
            $region82: #{pointwise_conv2d_bn.1} parent=77 // pred_fallthru
              _
            // Predicated region
            $region83: #{pointwise_conv2d_bn.1} parent=77 // pred_check
              _
            $region84: #{pointwise_conv2d_bn.1} parent=77 // pred_check_branch
              %314 = sbr.rel target = $region86
            $region85: #{pointwise_conv2d_bn.1} parent=77 // pred_region
              %s316 = ssub.s32 256, 1
              loop: start=0, step=1, limit=1
              $region87: #{pointwise_conv2d_bn.1} parent=85 // loop_pre_header
                _
              $region88: #{pointwise_conv2d_bn.1} parent=85 // loop_header
                %s318 = sphi 0, %s322
                %p319 = scmp.ge.s32.totalorder %s318, 1
                %s323 = sphi %s301, %s301
                %s324 = sphi %s308, %s308
              $region89: #{pointwise_conv2d_bn.1} parent=85 // loop_header_branch
                %321 = sbr.rel (%p319) target = $region93
              $region90: #{pointwise_conv2d_bn.1} parent=85 // loop_body
                %v325 = vld [vmem:[%s323] sm:%s316]
                %326 = vst [vmem:[%s324] sm:%s316] %v325
                %v327 = vld [vmem:[%s323 + $0x8] sm:%s316]
                %328 = vst [vmem:[%s324 + $0x10] sm:%s316] %v327
                %v329 = vld [vmem:[%s323 + $0x10] sm:%s316]
                %330 = vst [vmem:[%s324 + $0x20] sm:%s316] %v329
                %v331 = vld [vmem:[%s323 + $0x18] sm:%s316]
                %332 = vst [vmem:[%s324 + $0x30] sm:%s316] %v331
              $region91: #{pointwise_conv2d_bn.1} parent=85 // loop_footer
                %s322 = sadd.s32 1, %s318
              $region92: #{pointwise_conv2d_bn.1} parent=85 // loop_footer_branch
                %317 = sbr.rel target = $region88
              $region93: #{pointwise_conv2d_bn.1} parent=85 // loop_exit
                _
            $region86: #{pointwise_conv2d_bn.1} parent=77 // pred_fallthru
              _
          $region78: #{pointwise_conv2d_bn.1} parent=73 // pred_fallthru
            _
          %353 = vnop
        $region74: #{pointwise_conv2d_bn.1} parent=65 // pred_fallthru
          _
      $region66: #{pointwise_conv2d_bn.1} parent=5 // pred_fallthru
        _
      %p354 = scmp.le.s32.totalorder 2, %s9
      // Predicated region
      $region109: #{pointwise_conv2d_bn.1} parent=5 // pred_check
        %p355 = pneg %p354
      $region110: #{pointwise_conv2d_bn.1} parent=5 // pred_check_branch
        %357 = sbr.rel (%p355) target = $region112
      $region111: #{pointwise_conv2d_bn.1} parent=5 // pred_region
        %s358 = ssub.s32 %s9, 2
        // Predicated region
        $region113: #{pointwise_conv2d_bn.1} parent=111 // pred_check
          %p359 = pneg %p122
        $region114: #{pointwise_conv2d_bn.1} parent=111 // pred_check_branch
          %361 = sbr.rel (%p359) target = $region116
        $region115: #{pointwise_conv2d_bn.1} parent=111 // pred_region
          %s362 = sand.u32 %s107, 1
          %s363 = sand.u32 %s107, 1
          %s364 = smul.addr %s363, 32
          %s365 = scalar_lea.vmem [#allocation3], %s364
        $region116: #{pointwise_conv2d_bn.1} parent=111 // pred_fallthru
          _
      $region112: #{pointwise_conv2d_bn.1} parent=5 // pred_fallthru
        _
    $region6: #{pointwise_conv2d_bn.1} parent=1 // loop_footer
      %s13 = sadd.s32 1, %s9
    $region7: #{pointwise_conv2d_bn.1} parent=1 // loop_footer_branch
      %8 = sbr.rel target = $region3
    $region8: #{pointwise_conv2d_bn.1} parent=1 // loop_exit
      _

</llo_original>
